<compile_context>
chip_gen: v7x
topology: tpu7x:2x2x1
jax: 0.10.0
libtpu: 0.0.40
codegen_flags: <defaults>
</compile_context>

<pallas_src>
import math

import jax
import jax.numpy as jnp
from jax import lax
from jax.experimental import pallas as pl
from jax.experimental.pallas import tpu as pltpu

_INV_SQRT2 = 1.0 / math.sqrt(2.0)
_MiB = 1024 * 1024


def _round_up(a, b):
    return (a + b - 1) // b * b


def _sublane(dtype):
    # Rows per packed vreg sublane group: 8 for f32, 16 for bf16, 32 for int8/fp8.
    return max(8, 32 // jnp.dtype(dtype).itemsize)


def _maybe_cast_to_weight_dtype(x, w_dtype):
    # Keep the fast MXU path when weights are narrower (e.g. bf16 weights, f32 x).
    if x.dtype != w_dtype and jnp.dtype(w_dtype).itemsize < jnp.dtype(x.dtype).itemsize:
        return x.astype(w_dtype)
    return x


# --------------------------------------------------------------------------- #
# Kernels
# --------------------------------------------------------------------------- #
def _mlp_kernel_resident(x_ref, w1_ref, b1_ref, w2_ref, b2_ref, o_ref):
    # x_ref: (TM, D)  w1_ref: (D, H)  b1_ref: (1, H)  w2_ref: (H, D)  b2_ref: (1, D)
    x = _maybe_cast_to_weight_dtype(x_ref[...], w1_ref.dtype)

    h = jnp.dot(x, w1_ref[...], preferred_element_type=jnp.float32)
    h = h + b1_ref[...].astype(jnp.float32)
    # Exact (erf) GELU, matching torch.nn.GELU() default.
    h = 0.5 * h * (1.0 + lax.erf(h * _INV_SQRT2))
    # Dropout (p=0.5) is identity in eval mode.
    h = h.astype(w2_ref.dtype)

    y = jnp.dot(h, w2_ref[...], preferred_element_type=jnp.float32)
    y = y + b2_ref[...].astype(jnp.float32)
    o_ref[...] = y.astype(o_ref.dtype)


def _mlp_kernel_htiled(x_ref, w1_ref, b1_ref, w2_ref, b2_ref, o_ref, acc_ref):
    # Hidden dim tiled along grid axis 1 ("arbitrary", reduction last).
    hi = pl.program_id(1)

    @pl.when(hi == 0)
    def _():
        acc_ref[...] = jnp.zeros_like(acc_ref)

    x = _maybe_cast_to_weight_dtype(x_ref[...], w1_ref.dtype)

    h = jnp.dot(x, w1_ref[...], preferred_element_type=jnp.float32)
    h = h + b1_ref[...].astype(jnp.float32)
    h = 0.5 * h * (1.0 + lax.erf(h * _INV_SQRT2))
    # Dropout (p=0.5) is identity in eval mode.
    h = h.astype(w2_ref.dtype)

    acc_ref[...] += jnp.dot(h, w2_ref[...], preferred_element_type=jnp.float32)

    @pl.when(hi == pl.num_programs(1) - 1)
    def _():
        o_ref[...] = (acc_ref[...] + b2_ref[...].astype(jnp.float32)).astype(o_ref.dtype)


# --------------------------------------------------------------------------- #
# Parameter prep (done ONCE, not per forward call)
# --------------------------------------------------------------------------- #
def prepare_params(w1, b1, w2, b2, *, compute_dtype=None):
    """Pad feature dims to lane-dense multiples of 128 (exact: zero pads
    contribute 0) and optionally cast weights to a narrower compute dtype
    (e.g. jnp.bfloat16 for the fast MXU path; small accuracy delta vs f32)."""
    d_in, hidden = w1.shape
    d_in_p = _round_up(max(d_in, 128), 128)
    h_p = _round_up(max(hidden, 128), 128)

    if compute_dtype is not None:
        w1 = w1.astype(compute_dtype)
        w2 = w2.astype(compute_dtype)

    w1_p = jnp.pad(w1, ((0, d_in_p - d_in), (0, h_p - hidden)))
    b1_p = jnp.pad(b1.reshape(1, hidden), ((0, 0), (0, h_p - hidden)))
    w2_p = jnp.pad(w2, ((0, h_p - hidden), (0, d_in_p - d_in)))
    b2_p = jnp.pad(b2.reshape(1, d_in), ((0, 0), (0, d_in_p - d_in)))
    return {"w1": w1_p, "b1": b1_p, "w2": w2_p, "b2": b2_p,
            "d_in": d_in, "hidden": hidden}


# --------------------------------------------------------------------------- #
# Forward
# --------------------------------------------------------------------------- #
def mlp_block(x, params, *, tm_target=512):
    """x: (..., D_in); params from prepare_params()."""
    d_in = params["d_in"]
    w1_p, b1_p, w2_p, b2_p = params["w1"], params["b1"], params["w2"], params["b2"]
    d_in_p, h_p = w1_p.shape

    lead = x.shape[:-1]
    m = int(math.prod(lead)) if lead else 1
    x2d = x.reshape(m, d_in)
    if d_in_p != d_in:
        # Feature pad required for K-correctness (w1's padded rows are zero).
        x2d = jnp.pad(x2d, ((0, 0), (0, d_in_p - d_in)))

    # ---- generation-aware VMEM budget -------------------------------------
    try:
        vmem_cap = int(pltpu.get_tpu_info().vmem_capacity_bytes)
    except Exception:  # not on TPU hardware / query unavailable
        vmem_cap = 64 * _MiB
    vmem_limit = 100 * _MiB if vmem_cap >= 128 * _MiB else 48 * _MiB
    budget = vmem_limit - 2 * _MiB  # headroom for compiler internals

    x_bytes = jnp.dtype(x.dtype).itemsize
    out_bytes = x_bytes
    w_bytes = jnp.dtype(w1_p.dtype).itemsize
    b1_bytes = jnp.dtype(b1_p.dtype).itemsize
    b2_bytes = jnp.dtype(b2_p.dtype).itemsize

    def weight_bytes(th, nbuf):
        return (nbuf * (2 * d_in_p * th * w_bytes + th * b1_bytes)
                + d_in_p * b2_bytes)

    weight_budget = budget // 2
    if weight_bytes(h_p, 1) <= weight_budget:
        h_tiled = False
        th = h_p
        resident = weight_bytes(h_p, 1)
    else:
        # K(-hidden)-tiled fallback: pick the largest 128-multiple tile of the
        # hidden dim that divides h_p (no ragged H tail) and fits double-buffered.
        h_tiled = True
        th_cap = (weight_budget - d_in_p * b2_bytes) // (
            2 * (2 * d_in_p * w_bytes + b1_bytes))
        th_cap = max(128, th_cap // 128 * 128)
        n128 = h_p // 128
        th = 128
        for d in range(n128, 0, -1):
            if n128 % d == 0 and 128 * d <= th_cap:
                th = 128 * d
                break
        resident = weight_bytes(th, 2)
        # TODO(synk): if even th=128 overflows (enormous D_in), also tile D_in.

    # ---- row tile: dtype-aware sublane rounding, capped by remaining VMEM ---
    per_row = (d_in_p * (2 * x_bytes + 2 * out_bytes + (4 if h_tiled else 0))
               + th * (4 + w_bytes))  # f32 hidden temp + its w2-dtype cast
    row_budget = max(0, budget - resident)
    sub = _sublane(x.dtype)
    tm_cap = max(sub, (row_budget // per_row) // sub * sub)
    tm = min(tm_target, tm_cap, _round_up(m, sub))
    tm = _round_up(tm, sub)
    grid_m = pl.cdiv(m, tm)  # ragged last M block is masked by Pallas

    cost = pl.CostEstimate(
        flops=4 * m * d_in_p * h_p,
        transcendentals=m * h_p,
        bytes_accessed=(2 * m * d_in_p * x_bytes
                        + 2 * d_in_p * h_p * w_bytes
                        + h_p * b1_bytes + d_in_p * b2_bytes),
    )
    compiler_params = pltpu.CompilerParams(
        dimension_semantics=("parallel",) if not h_tiled else ("parallel", "arbitrary"),
        vmem_limit_bytes=vmem_limit,
    )
    out_shape = jax.ShapeDtypeStruct((m, d_in_p), x.dtype)

    if not h_tiled:
        out = pl.pallas_call(
            _mlp_kernel_resident,
            out_shape=out_shape,
            grid_spec=pltpu.PrefetchScalarGridSpec(
                num_scalar_prefetch=0,
                grid=(grid_m,),
                in_specs=[
                    pl.BlockSpec((tm, d_in_p), lambda i: (i, 0)),
                    pl.BlockSpec((d_in_p, h_p), lambda i: (0, 0),
                                 pipeline_mode=pl.Buffered(1)),
                    pl.BlockSpec((1, h_p), lambda i: (0, 0),
                                 pipeline_mode=pl.Buffered(1)),
                    pl.BlockSpec((h_p, d_in_p), lambda i: (0, 0),
                                 pipeline_mode=pl.Buffered(1)),
                    pl.BlockSpec((1, d_in_p), lambda i: (0, 0),
                                 pipeline_mode=pl.Buffered(1)),
                ],
                out_specs=pl.BlockSpec((tm, d_in_p), lambda i: (i, 0)),
            ),
            compiler_params=compiler_params,
            cost_estimate=cost,
        )(x2d, w1_p, b1_p, w2_p, b2_p)
    else:
        grid_h = h_p // th
        out = pl.pallas_call(
            _mlp_kernel_htiled,
            out_shape=out_shape,
            grid_spec=pltpu.PrefetchScalarGridSpec(
                num_scalar_prefetch=0,
                grid=(grid_m, grid_h),
                in_specs=[
                    pl.BlockSpec((tm, d_in_p), lambda i, h: (i, 0)),
                    pl.BlockSpec((d_in_p, th), lambda i, h: (0, h)),
                    pl.BlockSpec((1, th), lambda i, h: (0, h)),
                    pl.BlockSpec((th, d_in_p), lambda i, h: (h, 0)),
                    pl.BlockSpec((1, d_in_p), lambda i, h: (0, 0),
                                 pipeline_mode=pl.Buffered(1)),
                ],
                out_specs=pl.BlockSpec((tm, d_in_p), lambda i, h: (i, 0)),
                scratch_shapes=[pltpu.VMEM((tm, d_in_p), jnp.float32)],
            ),
            compiler_params=compiler_params,
            cost_estimate=cost,
        )(x2d, w1_p, b1_p, w2_p, b2_p)

    if d_in_p != d_in:
        out = out[:, :d_in]
    return out.reshape(*lead, d_in)


# --------------------------------------------------------------------------- #
# Init (mimics PyTorch nn.Linear defaults), demo & check
# --------------------------------------------------------------------------- #
def init_params(key, input_size, hidden_size, dtype=jnp.float32):
    k1, k2, k3, k4 = jax.random.split(key, 4)
    bound1 = 1.0 / math.sqrt(input_size)
    bound2 = 1.0 / math.sqrt(hidden_size)
    # Weights stored pre-transposed: (in_features, out_features).
    w1 = jax.random.uniform(k1, (input_size, hidden_size), dtype, -bound1, bound1)
    b1 = jax.random.uniform(k2, (hidden_size,), dtype, -bound1, bound1)
    w2 = jax.random.uniform(k3, (hidden_size, input_size), dtype, -bound2, bound2)
    b2 = jax.random.uniform(k4, (input_size,), dtype, -bound2, bound2)
    return w1, b1, w2, b2


if __name__ == "__main__":
    batch, seq, input_size, hidden_size = 2, 8, 32, 64

    key = jax.random.PRNGKey(0)
    kx, kp = jax.random.split(key)
    x = jax.random.normal(kx, (batch, seq, input_size), dtype=jnp.float32)
    w1, b1, w2, b2 = init_params(kp, input_size, hidden_size)

    params = prepare_params(w1, b1, w2, b2)   # pad/cast once, not per forward
    out = mlp_block(x, params)
    jax.block_until_ready(out)

    # Sanity check against a plain-JAX reference (eval-mode MLP, exact-erf GELU).
    h_ref = x @ w1 + b1
    h_ref = 0.5 * h_ref * (1.0 + lax.erf(h_ref / math.sqrt(2.0)))
    y_ref = h_ref @ w2 + b2
    assert out.shape == x.shape
    assert jnp.allclose(out, y_ref, atol=1e-5, rtol=1e-5)

    print("KERNEL_OK")
</pallas_src>

<mosaic_0001>
module attributes {stable_mosaic.version = 11 : i64} {
  func.func @_mlp_kernel_resident(%arg0: i32, %arg1: memref<16x128xf32, #tpu.memory_space<vmem>>, %arg2: memref<128x128xf32, #tpu.memory_space<vmem>>, %arg3: memref<1x128xf32, #tpu.memory_space<vmem>>, %arg4: memref<128x128xf32, #tpu.memory_space<vmem>>, %arg5: memref<1x128xf32, #tpu.memory_space<vmem>>, %arg6: memref<16x128xf32, #tpu.memory_space<vmem>>) attributes {dimension_semantics = [#tpu.dimension_semantics<parallel>], iteration_bounds = array<i64: 1>, scalar_prefetch = 0 : i64, scratch_operands = 0 : i64, tpu.core_type = #tpu.core_type<tc>, window_params = [{transform_indices = @transform_0, window_bounds = array<i64: 16, 128>}, {pipeline_mode = #tpu.pipeline_mode<synchronous>, transform_indices = @transform_1, window_bounds = array<i64: 128, 128>}, {pipeline_mode = #tpu.pipeline_mode<synchronous>, transform_indices = @transform_2, window_bounds = array<i64: 1, 128>}, {pipeline_mode = #tpu.pipeline_mode<synchronous>, transform_indices = @transform_3, window_bounds = array<i64: 128, 128>}, {pipeline_mode = #tpu.pipeline_mode<synchronous>, transform_indices = @transform_4, window_bounds = array<i64: 1, 128>}, {transform_indices = @transform_5, window_bounds = array<i64: 16, 128>}]} {
    %c0 = arith.constant 0 : index
    %c0_0 = arith.constant 0 : index
    %0 = vector.load %arg1[%c0, %c0_0] : memref<16x128xf32, #tpu.memory_space<vmem>>, vector<16x128xf32>
    %c0_1 = arith.constant 0 : index
    %c0_2 = arith.constant 0 : index
    %1 = vector.load %arg2[%c0_1, %c0_2] : memref<128x128xf32, #tpu.memory_space<vmem>>, vector<128x128xf32>
    %cst = arith.constant dense<0.000000e+00> : vector<16x128xf32>
    %2 = tpu.matmul %0, %1, %cst {dimension_numbers = #tpu.dot_dimension_numbers<[1], [0], [0], [1], [0, 0, 1, 1], [], []>} : vector<16x128xf32>, vector<128x128xf32>, vector<16x128xf32> -> vector<16x128xf32>
    %c0_3 = arith.constant 0 : index
    %c0_4 = arith.constant 0 : index
    %3 = vector.load %arg3[%c0_3, %c0_4] : memref<1x128xf32, #tpu.memory_space<vmem>>, vector<1x128xf32>
    %4 = vector.broadcast %3 : vector<1x128xf32> to vector<16x128xf32>
    %5 = arith.addf %2, %4 : vector<16x128xf32>
    %cst_5 = arith.constant 5.000000e-01 : f32
    %6 = vector.broadcast %cst_5 : f32 to vector<16x128xf32>
    %7 = arith.mulf %6, %5 : vector<16x128xf32>
    %cst_6 = arith.constant 0.707106769 : f32
    %8 = vector.broadcast %cst_6 : f32 to vector<16x128xf32>
    %9 = arith.mulf %5, %8 : vector<16x128xf32>
    %10 = math.erf %9 : vector<16x128xf32>
    %cst_7 = arith.constant 1.000000e+00 : f32
    %11 = vector.broadcast %cst_7 : f32 to vector<16x128xf32>
    %12 = arith.addf %11, %10 : vector<16x128xf32>
    %13 = arith.mulf %7, %12 : vector<16x128xf32>
    %c0_8 = arith.constant 0 : index
    %c0_9 = arith.constant 0 : index
    %14 = vector.load %arg4[%c0_8, %c0_9] : memref<128x128xf32, #tpu.memory_space<vmem>>, vector<128x128xf32>
    %cst_10 = arith.constant dense<0.000000e+00> : vector<16x128xf32>
    %15 = tpu.matmul %13, %14, %cst_10 {dimension_numbers = #tpu.dot_dimension_numbers<[1], [0], [0], [1], [0, 0, 1, 1], [], []>} : vector<16x128xf32>, vector<128x128xf32>, vector<16x128xf32> -> vector<16x128xf32>
    %c0_11 = arith.constant 0 : index
    %c0_12 = arith.constant 0 : index
    %16 = vector.load %arg5[%c0_11, %c0_12] : memref<1x128xf32, #tpu.memory_space<vmem>>, vector<1x128xf32>
    %17 = vector.broadcast %16 : vector<1x128xf32> to vector<16x128xf32>
    %18 = arith.addf %15, %17 : vector<16x128xf32>
    %c0_13 = arith.constant 0 : index
    %c0_14 = arith.constant 0 : index
    %19 = vector.load %arg6[%c0_13, %c0_14] : memref<16x128xf32, #tpu.memory_space<vmem>>, vector<16x128xf32>
    tpu.vector_store %arg6[%c0_13, %c0_14], %18 {strides = array<i32>} : memref<16x128xf32, #tpu.memory_space<vmem>>, vector<16x128xf32>,
    return
  }
  func.func @transform_0(%arg0: i32) -> (i32, i32) {
    %c0_i32 = arith.constant 0 : i32
    %c0_i32_0 = arith.constant 0 : i32
    return %arg0, %c0_i32 : i32, i32
  }
  func.func @transform_1(%arg0: i32) -> (i32, i32) {
    %c0_i32 = arith.constant 0 : i32
    %c0_i32_0 = arith.constant 0 : i32
    %c0_i32_1 = arith.constant 0 : i32
    return %c0_i32, %c0_i32_0 : i32, i32
  }
  func.func @transform_2(%arg0: i32) -> (i32, i32) {
    %c0_i32 = arith.constant 0 : i32
    %c0_i32_0 = arith.constant 0 : i32
    %c0_i32_1 = arith.constant 0 : i32
    return %c0_i32, %c0_i32_0 : i32, i32
  }
  func.func @transform_3(%arg0: i32) -> (i32, i32) {
    %c0_i32 = arith.constant 0 : i32
    %c0_i32_0 = arith.constant 0 : i32
    %c0_i32_1 = arith.constant 0 : i32
    return %c0_i32, %c0_i32_0 : i32, i32
  }
  func.func @transform_4(%arg0: i32) -> (i32, i32) {
    %c0_i32 = arith.constant 0 : i32
    %c0_i32_0 = arith.constant 0 : i32
    %c0_i32_1 = arith.constant 0 : i32
    return %c0_i32, %c0_i32_0 : i32, i32
  }
  func.func @transform_5(%arg0: i32) -> (i32, i32) {
    %c0_i32 = arith.constant 0 : i32
    %c0_i32_0 = arith.constant 0 : i32
    return %arg0, %c0_i32 : i32, i32
  }
}

</mosaic_0001>

<llo_original>
// kernel: tpu_custom_call.1
$region0: #{tpu_custom_call.1}
  #allocation0 [shape = 'u32[]', space=smem, size = 0x4, offset = 0x4, fixed_abs, tag = 'smem constant byte address 0x4 - core index']
  #allocation1 [shape = 'u32[144,128]{1,0:T(1,128)}', space=vmem, size = 0x12000, scoped, tag = 'internal scratch']
  %s0 = inlined_call_operand.hbm [shape: f32[16,128], index: 0, kind: input, shape index: {}]
  %s1 = inlined_call_operand.hbm [shape: f32[128,128], index: 1, kind: input, shape index: {}]
  %s2 = inlined_call_operand.vmem [shape: f32[1,128], index: 2, kind: input, shape index: {}]
  %s3 = inlined_call_operand.hbm [shape: f32[128,128], index: 3, kind: input, shape index: {}]
  %s4 = inlined_call_operand.vmem [shape: f32[1,128], index: 4, kind: input, shape index: {}]
  %s5 = inlined_call_operand.hbm [shape: f32[16,128], index: 5, kind: output, shape index: {}]
  %s6 = sld [smem:[#allocation0]]
  $region42: #{tpu_custom_call.1} parent=0
    _
  %s8 = ssub.s32 1, %s6
  %s9 = scalar_select 0, %s8, %s6
  $region1: #{tpu_custom_call.1} parent=0
    #allocation2 [shape = 'u8[8192]{0}', space=vmem, size = 0x2000, scoped, tag = 'input window, operand 0, single buffered']
    #allocation3 [shape = 's32[1]{0}', space=sflag, size = 0x4, scoped, tag = 'scoped memory for tpu_custom_call.1']
    #allocation4 [shape = 's32[1]{0}', space=sflag, size = 0x4, scoped, tag = 'scoped memory for tpu_custom_call.1']
    #allocation5 [shape = 'u8[65536]{0}', space=vmem, size = 0x10000, scoped, tag = 'input window, operand 1, single buffered']
    #allocation6 [shape = 's32[1]{0}', space=sflag, size = 0x4, scoped, tag = 'scoped memory for tpu_custom_call.1']
    #allocation7 [shape = 'u8[65536]{0}', space=vmem, size = 0x10000, scoped, tag = 'input window, operand 3, single buffered']
    #allocation8 [shape = 'u8[8192]{0}', space=vmem, size = 0x2000, scoped, tag = 'output window, operand 0, single buffered']
    %10 = vsyncpa [#allocation3], 0
    %11 = vsyncpa [#allocation6], 0
    %12 = vsyncpa [#allocation4], 0
    // Predicated region
    $region2: #{tpu_custom_call.1} parent=1 // pred_check
      _
    $region3: #{tpu_custom_call.1} parent=1 // pred_check_branch
      %14 = sbr.rel (0) target = $region5
    $region4: #{tpu_custom_call.1} parent=1 // pred_region
      %s16 = ssub.s32 256, 256
      %17 = vsyncadd [#allocation3], %s16
      %s18 = sshll.u32 [#allocation2], 4
      %s19 = int_to_ptr.vmem [resolvable:$true] %s18
      %24 = dma.hbm_to_vmem [thread:$0]  %s0, 256, %s19, [#allocation3], 128, 128, 8
    $region5: #{tpu_custom_call.1} parent=1 // pred_fallthru
      _
    // Predicated region
    $region6: #{tpu_custom_call.1} parent=1 // pred_check
      _
    $region7: #{tpu_custom_call.1} parent=1 // pred_check_branch
      %26 = sbr.rel (0) target = $region9
    $region8: #{tpu_custom_call.1} parent=1 // pred_region
      %s28 = ssub.s32 2048, 2048
      %29 = vsyncadd [#allocation6], %s28
      %s30 = sshll.u32 [#allocation5], 4
      %s31 = int_to_ptr.vmem [resolvable:$true] %s30
      %36 = dma.hbm_to_vmem [thread:$0]  %s1, 2048, %s31, [#allocation6], 128, 128, 8
    $region9: #{tpu_custom_call.1} parent=1 // pred_fallthru
      _
    // Predicated region
    $region10: #{tpu_custom_call.1} parent=1 // pred_check
      _
    $region11: #{tpu_custom_call.1} parent=1 // pred_check_branch
      %38 = sbr.rel (0) target = $region13
    $region12: #{tpu_custom_call.1} parent=1 // pred_region
      _
    $region13: #{tpu_custom_call.1} parent=1 // pred_fallthru
      _
    // Predicated region
    $region14: #{tpu_custom_call.1} parent=1 // pred_check
      _
    $region15: #{tpu_custom_call.1} parent=1 // pred_check_branch
      %40 = sbr.rel (0) target = $region17
    $region16: #{tpu_custom_call.1} parent=1 // pred_region
      %s42 = ssub.s32 2048, 2048
      %43 = vsyncadd [#allocation6], %s42
      %s44 = sshll.u32 [#allocation7], 4
      %s45 = int_to_ptr.vmem [resolvable:$true] %s44
      %50 = dma.hbm_to_vmem [thread:$0]  %s3, 2048, %s45, [#allocation6], 128, 128, 8
    $region17: #{tpu_custom_call.1} parent=1 // pred_fallthru
      _
    // Predicated region
    $region18: #{tpu_custom_call.1} parent=1 // pred_check
      _
    $region19: #{tpu_custom_call.1} parent=1 // pred_check_branch
      %52 = sbr.rel (0) target = $region21
    $region20: #{tpu_custom_call.1} parent=1 // pred_region
      _
    $region21: #{tpu_custom_call.1} parent=1 // pred_fallthru
      _
    // Predicated region
    $region22: #{tpu_custom_call.1} parent=1 // pred_check
      _
    $region23: #{tpu_custom_call.1} parent=1 // pred_check_branch
      %54 = sbr.rel (0) target = $region25
    $region24: #{tpu_custom_call.1} parent=1 // pred_region
      %55 = dma.done [#allocation3], 256
    $region25: #{tpu_custom_call.1} parent=1 // pred_fallthru
      _
    // Predicated region
    $region26: #{tpu_custom_call.1} parent=1 // pred_check
      _
    $region27: #{tpu_custom_call.1} parent=1 // pred_check_branch
      %57 = sbr.rel (0) target = $region29
    $region28: #{tpu_custom_call.1} parent=1 // pred_region
      %58 = dma.done [#allocation6], 2048
    $region29: #{tpu_custom_call.1} parent=1 // pred_fallthru
      _
    // Predicated region
    $region30: #{tpu_custom_call.1} parent=1 // pred_check
      _
    $region31: #{tpu_custom_call.1} parent=1 // pred_check_branch
      %60 = sbr.rel (0) target = $region33
    $region32: #{tpu_custom_call.1} parent=1 // pred_region
      %61 = dma.done [#allocation6], 2048
    $region33: #{tpu_custom_call.1} parent=1 // pred_fallthru
      _
    %v62 = vld [vmem:[#allocation2] sm:$0xff]
    %v63 = vld [vmem:[#allocation2 + $0x8] sm:$0xff]
    %v64 = vld [vmem:[#allocation5] sm:$0xff]
    %v65 = vld [vmem:[#allocation5 + $0x8] sm:$0xff]
    %v66 = vld [vmem:[#allocation5 + $0x10] sm:$0xff]
    %v67 = vld [vmem:[#allocation5 + $0x18] sm:$0xff]
    %v68 = vld [vmem:[#allocation5 + $0x20] sm:$0xff]
    %v69 = vld [vmem:[#allocation5 + $0x28] sm:$0xff]
    %v70 = vld [vmem:[#allocation5 + $0x30] sm:$0xff]
    %v71 = vld [vmem:[#allocation5 + $0x38] sm:$0xff]
    %v72 = vld [vmem:[#allocation5 + $0x40] sm:$0xff]
    %v73 = vld [vmem:[#allocation5 + $0x48] sm:$0xff]
    %v74 = vld [vmem:[#allocation5 + $0x50] sm:$0xff]
    %v75 = vld [vmem:[#allocation5 + $0x58] sm:$0xff]
    %v76 = vld [vmem:[#allocation5 + $0x60] sm:$0xff]
    %v77 = vld [vmem:[#allocation5 + $0x68] sm:$0xff]
    %v78 = vld [vmem:[#allocation5 + $0x70] sm:$0xff]
    %v79 = vld [vmem:[#allocation5 + $0x78] sm:$0xff]
    %v80 = vld [vmem:[%s2] sm:$0x1]
    %v82 = vlaneseq
    %v83 = vshrl.u32 %v82, 7
    %v84 = vsub.s32 0, %v83
    %v85 = vrot.slane %v80, %v84
    %87 = vmatprep.subr.mxu0 0.0
    %88 = vmatpush1.msra.mxu0 %v64
    %89 = vmatprep.subr.mxu0 0.0
    %90 = vmatpush1.msra.mxu0 %v65
    %91 = vmatprep.subr.mxu0 0.0
    %92 = vmatpush1.msra.mxu0 %v66
    %93 = vmatprep.subr.mxu0 0.0
    %94 = vmatpush1.msra.mxu0 %v67
    %95 = vmatprep.subr.mxu0 0.0
    %96 = vmatpush1.msra.mxu0 %v68
    %97 = vmatprep.subr.mxu0 0.0
    %98 = vmatpush1.msra.mxu0 %v69
    %99 = vmatprep.subr.mxu0 0.0
    %100 = vmatpush1.msra.mxu0 %v70
    %101 = vmatprep.subr.mxu0 0.0
    %102 = vmatpush1.msra.mxu0 %v71
    %103 = vmatprep.subr.mxu0 0.0
    %104 = vmatpush1.msra.mxu0 %v72
    %105 = vmatprep.subr.mxu0 0.0
    %106 = vmatpush1.msra.mxu0 %v73
    %107 = vmatprep.subr.mxu0 0.0
    %108 = vmatpush1.msra.mxu0 %v74
    %109 = vmatprep.subr.mxu0 0.0
    %110 = vmatpush1.msra.mxu0 %v75
    %111 = vmatprep.subr.mxu0 0.0
    %112 = vmatpush1.msra.mxu0 %v76
    %113 = vmatprep.subr.mxu0 0.0
    %114 = vmatpush1.msra.mxu0 %v77
    %115 = vmatprep.subr.mxu0 0.0
    %116 = vmatpush1.msra.mxu0 %v78
    %117 = vmatprep.subr.mxu0 0.0
    %118 = vmatpush1.msra.mxu0 %v79
    %119 = vmatprep.subr.mxu0 0.0
    %120 = vmatpush1.msra.mxu0 0.0
    %121 = vmatprep.subr.mxu0 0.0
    %122 = vmatpush1.msra.mxu0 0.0
    %123 = vmatprep.subr.mxu0 0.0
    %124 = vmatpush1.msra.mxu0 0.0
    %125 = vmatprep.subr.mxu0 0.0
    %126 = vmatpush1.msra.mxu0 0.0
    %127 = vmatprep.subr.mxu0 0.0
    %128 = vmatpush1.msra.mxu0 0.0
    %129 = vmatprep.subr.mxu0 0.0
    %130 = vmatpush1.msra.mxu0 0.0
    %131 = vmatprep.subr.mxu0 0.0
    %132 = vmatpush1.msra.mxu0 0.0
    %133 = vmatprep.subr.mxu0 0.0
    %134 = vmatpush1.msra.mxu0 0.0
    %135 = vmatprep.subr.mxu0 0.0
    %136 = vmatpush1.msra.mxu0 0.0
    %137 = vmatprep.subr.mxu0 0.0
    %138 = vmatpush1.msra.mxu0 0.0
    %139 = vmatprep.subr.mxu0 0.0
    %140 = vmatpush1.msra.mxu0 0.0
    %141 = vmatprep.subr.mxu0 0.0
    %142 = vmatpush1.msra.mxu0 0.0
    %143 = vmatprep.subr.mxu0 0.0
    %144 = vmatpush1.msra.mxu0 0.0
    %145 = vmatprep.subr.mxu0 0.0
    %146 = vmatpush1.msra.mxu0 0.0
    %147 = vmatprep.subr.mxu0 0.0
    %148 = vmatpush1.msra.mxu0 0.0
    %149 = vmatprep.subr.mxu0 0.0
    %150 = vmatpush1.msra.mxu0 0.0
    %151 = vmatprep.mubr.f32.mxu0 0.0
    %152 = vmatmul.mubr.f32.gmra.mrb[0].mxu0 %v62
    %v153 = vpop.f32.mrb[0].mxu0
    %v154 = vadd.f32 %v85, %v153
    %v155 = vpop.f32.mrb[0].mxu0
    %156 = vmatprep.mubr.f32.mxu0 0.0
    %157 = vmatmul.mubr.f32.gmra.mrb[0].mxu0 %v63
    %v158 = vpop.f32.mrb[0].mxu0
    %v159 = vadd.f32 %v85, %v158
    %v160 = vpop.f32.mrb[0].mxu0
    %161 = vdwg.mxu0
    %v162 = vmul.f32 %v154, 0.5
    %v163 = vmul.f32 %v159, 0.5
    %v164 = vmul.f32 %v154, 0.70710677
    %v165 = vmul.f32 %v159, 0.70710677
    %v166 = verf.f32.pop %v164
    %v167 = verf.f32.pop %v165
    %v168 = vadd.f32 %v166, 1.0
    %v169 = vadd.f32 %v167, 1.0
    %v170 = vmul.f32 %v162, %v168
    %v171 = vmul.f32 %v163, %v169
    %v172 = vld [vmem:[#allocation7] sm:$0xff]
    %v173 = vld [vmem:[#allocation7 + $0x8] sm:$0xff]
    %v174 = vld [vmem:[#allocation7 + $0x10] sm:$0xff]
    %v175 = vld [vmem:[#allocation7 + $0x18] sm:$0xff]
    %v176 = vld [vmem:[#allocation7 + $0x20] sm:$0xff]
    %v177 = vld [vmem:[#allocation7 + $0x28] sm:$0xff]
    %v178 = vld [vmem:[#allocation7 + $0x30] sm:$0xff]
    %v179 = vld [vmem:[#allocation7 + $0x38] sm:$0xff]
    %v180 = vld [vmem:[#allocation7 + $0x40] sm:$0xff]
    %v181 = vld [vmem:[#allocation7 + $0x48] sm:$0xff]
    %v182 = vld [vmem:[#allocation7 + $0x50] sm:$0xff]
    %v183 = vld [vmem:[#allocation7 + $0x58] sm:$0xff]
    %v184 = vld [vmem:[#allocation7 + $0x60] sm:$0xff]
    %v185 = vld [vmem:[#allocation7 + $0x68] sm:$0xff]
    %v186 = vld [vmem:[#allocation7 + $0x70] sm:$0xff]
    %v187 = vld [vmem:[#allocation7 + $0x78] sm:$0xff]
    %v188 = vld [vmem:[%s4] sm:$0x1]
    %v190 = vlaneseq
    %v191 = vshrl.u32 %v190, 7
    %v192 = vsub.s32 0, %v191
    %v193 = vrot.slane %v188, %v192
    %195 = vmatprep.subr.mxu0 0.0
    %196 = vmatpush1.msra.mxu0 %v172
    %197 = vmatprep.subr.mxu0 0.0
    %198 = vmatpush1.msra.mxu0 %v173
    %199 = vmatprep.subr.mxu0 0.0
    %200 = vmatpush1.msra.mxu0 %v174
    %201 = vmatprep.subr.mxu0 0.0
    %202 = vmatpush1.msra.mxu0 %v175
    %203 = vmatprep.subr.mxu0 0.0
    %204 = vmatpush1.msra.mxu0 %v176
    %205 = vmatprep.subr.mxu0 0.0
    %206 = vmatpush1.msra.mxu0 %v177
    %207 = vmatprep.subr.mxu0 0.0
    %208 = vmatpush1.msra.mxu0 %v178
    %209 = vmatprep.subr.mxu0 0.0
    %210 = vmatpush1.msra.mxu0 %v179
    %211 = vmatprep.subr.mxu0 0.0
    %212 = vmatpush1.msra.mxu0 %v180
    %213 = vmatprep.subr.mxu0 0.0
    %214 = vmatpush1.msra.mxu0 %v181
    %215 = vmatprep.subr.mxu0 0.0
    %216 = vmatpush1.msra.mxu0 %v182
    %217 = vmatprep.subr.mxu0 0.0
    %218 = vmatpush1.msra.mxu0 %v183
    %219 = vmatprep.subr.mxu0 0.0
    %220 = vmatpush1.msra.mxu0 %v184
    %221 = vmatprep.subr.mxu0 0.0
    %222 = vmatpush1.msra.mxu0 %v185
    %223 = vmatprep.subr.mxu0 0.0
    %224 = vmatpush1.msra.mxu0 %v186
    %225 = vmatprep.subr.mxu0 0.0
    %226 = vmatpush1.msra.mxu0 %v187
    %227 = vmatprep.subr.mxu0 0.0
    %228 = vmatpush1.msra.mxu0 0.0
    %229 = vmatprep.subr.mxu0 0.0
    %230 = vmatpush1.msra.mxu0 0.0
    %231 = vmatprep.subr.mxu0 0.0
    %232 = vmatpush1.msra.mxu0 0.0
    %233 = vmatprep.subr.mxu0 0.0
    %234 = vmatpush1.msra.mxu0 0.0
    %235 = vmatprep.subr.mxu0 0.0
    %236 = vmatpush1.msra.mxu0 0.0
    %237 = vmatprep.subr.mxu0 0.0
    %238 = vmatpush1.msra.mxu0 0.0
    %239 = vmatprep.subr.mxu0 0.0
    %240 = vmatpush1.msra.mxu0 0.0
    %241 = vmatprep.subr.mxu0 0.0
    %242 = vmatpush1.msra.mxu0 0.0
    %243 = vmatprep.subr.mxu0 0.0
    %244 = vmatpush1.msra.mxu0 0.0
    %245 = vmatprep.subr.mxu0 0.0
    %246 = vmatpush1.msra.mxu0 0.0
    %247 = vmatprep.subr.mxu0 0.0
    %248 = vmatpush1.msra.mxu0 0.0
    %249 = vmatprep.subr.mxu0 0.0
    %250 = vmatpush1.msra.mxu0 0.0
    %251 = vmatprep.subr.mxu0 0.0
    %252 = vmatpush1.msra.mxu0 0.0
    %253 = vmatprep.subr.mxu0 0.0
    %254 = vmatpush1.msra.mxu0 0.0
    %255 = vmatprep.subr.mxu0 0.0
    %256 = vmatpush1.msra.mxu0 0.0
    %257 = vmatprep.subr.mxu0 0.0
    %258 = vmatpush1.msra.mxu0 0.0
    %259 = vmatprep.mubr.f32.mxu0 0.0
    %260 = vmatmul.mubr.f32.gmra.mrb[0].mxu0 %v170
    %v261 = vpop.f32.mrb[0].mxu0
    %v262 = vadd.f32 %v193, %v261
    %v263 = vpop.f32.mrb[0].mxu0
    %264 = vmatprep.mubr.f32.mxu0 0.0
    %265 = vmatmul.mubr.f32.gmra.mrb[0].mxu0 %v171
    %v266 = vpop.f32.mrb[0].mxu0
    %v267 = vadd.f32 %v193, %v266
    %v268 = vpop.f32.mrb[0].mxu0
    %269 = vdwg.mxu0
    %270 = vst [vmem:[#allocation8] sm:$0xff] %v262
    %271 = vst [vmem:[#allocation8 + $0x8] sm:$0xff] %v267
    // Predicated region
    $region34: #{tpu_custom_call.1} parent=1 // pred_check
      _
    $region35: #{tpu_custom_call.1} parent=1 // pred_check_branch
      %273 = sbr.rel (0) target = $region37
    $region36: #{tpu_custom_call.1} parent=1 // pred_region
      %s275 = ssub.s32 256, 256
      %276 = vsyncadd [#allocation4], %s275
      %s277 = sshll.u32 [#allocation8], 4
      %s278 = int_to_ptr.vmem [resolvable:$true] %s277
      %283 = dma.vmem_to_hbm [thread:$0]  %s278, 256, %s5, [#allocation4], 128, 128, 8
    $region37: #{tpu_custom_call.1} parent=1 // pred_fallthru
      _
    // Predicated region
    $region38: #{tpu_custom_call.1} parent=1 // pred_check
      _
    $region39: #{tpu_custom_call.1} parent=1 // pred_check_branch
      %285 = sbr.rel (0) target = $region41
    $region40: #{tpu_custom_call.1} parent=1 // pred_region
      %286 = dma.done [#allocation4], 256
    $region41: #{tpu_custom_call.1} parent=1 // pred_fallthru
      _
    %287 = vsyncpa [#allocation3], 1
    %288 = vsyncpa [#allocation6], 1
    %289 = vsyncpa [#allocation4], 1

</llo_original>
